<compile_context>
chip_gen: v7x
topology: tpu7x:2x2x1
jax: 0.10.0
libtpu: 0.0.40
codegen_flags: <defaults>
</compile_context>

<pallas_src>
import functools

import jax
import jax.numpy as jnp
from jax.experimental import pallas as pl
from jax.experimental.pallas import tpu as pltpu

LANES = 128
SUBLANES = 8
ROWS_PER_BLOCK = 8192   # (8192,128) f32 = 4 MiB per buffer
CHUNK_ROWS = 512        # in-kernel chunk -> ~256 KiB live temporaries
NUM_SPLITS = 2          # leading "parallel" axis (2 TCs on v7x)


def _mse_kernel(p_ref, t_ref, o_ref, acc_ref, *,
                rb, chunk, blocks_per_split, total_rows):
    c = pl.program_id(0)   # parallel split (maps to a TensorCore on megacore chips)
    k = pl.program_id(1)   # sequential reduction axis

    @pl.when(k == 0)
    def _init():
        acc_ref[...] = jnp.zeros_like(acc_ref)

    # Global (unclamped) first-row index of this block.  Rows at or past
    # `total_rows` (partial boundary block, or the duplicate block produced by
    # the clamped index_map on an uneven split) must not contribute.
    row0 = (c * blocks_per_split + k) * rb
    n_chunks = rb // chunk

    def _sq(i):
        off = pl.multiple_of(i * chunk, chunk)
        d = (p_ref[pl.ds(off, chunk), :].astype(jnp.float32)
             - t_ref[pl.ds(off, chunk), :].astype(jnp.float32))
        return d * d, off

    @pl.when(row0 + rb <= total_rows)
    def _full_block():  # hot path: no mask, pure VPU fold to (8,128)
        @pl.loop(0, n_chunks)
        def _(i):
            sq, _ = _sq(i)
            acc_ref[...] += sq.reshape(chunk // SUBLANES, SUBLANES, LANES).sum(axis=0)

    @pl.when(row0 + rb > total_rows)
    def _partial_block():  # cold path: mask rows beyond the real array
        @pl.loop(0, n_chunks)
        def _(i):
            sq, off = _sq(i)
            rid = (row0 + off
                   + jax.lax.broadcasted_iota(jnp.int32, (chunk, LANES), 0))
            sq = jnp.where(rid < total_rows, sq, jnp.float32(0.0))
            acc_ref[...] += sq.reshape(chunk // SUBLANES, SUBLANES, LANES).sum(axis=0)

    @pl.when(k == pl.num_programs(1) - 1)
    def _finalize():
        o_ref[...] = acc_ref[...]


def diffusion_loss(pred, target):
    """MSE loss: mean((pred - target)**2), computed in a Pallas TPU kernel."""
    assert pred.shape == target.shape
    n_elems = pred.size

    p_flat = jnp.ravel(pred)
    t_flat = jnp.ravel(target)

    # Sublane multiple for the narrower input dtype (f32: 8, bf16: 16, i8/fp8: 32).
    itemsize = min(jnp.dtype(pred.dtype).itemsize, jnp.dtype(target.dtype).itemsize)
    mult = SUBLANES * max(1, 4 // itemsize)
    pad_unit = LANES * mult

    # Only pad when numel isn't already tile-aligned; zero-padded elements have
    # pred == target so they contribute exactly 0 and need no extra masking.
    if n_elems % pad_unit != 0:
        pad = pad_unit - n_elems % pad_unit
        p_flat = jnp.pad(p_flat, (0, pad))
        t_flat = jnp.pad(t_flat, (0, pad))

    rows = p_flat.size // LANES
    p2d = p_flat.reshape(rows, LANES)   # layout-preserving, no HBM copy
    t2d = t_flat.reshape(rows, LANES)

    # Block rows: 8192 for the HBM roofline, or the full (small) array.
    rb = ROWS_PER_BLOCK if rows >= ROWS_PER_BLOCK else rows
    chunk = CHUNK_ROWS if rb % CHUNK_ROWS == 0 else rb
    n_blocks = pl.cdiv(rows, rb)
    splits = NUM_SPLITS if n_blocks >= NUM_SPLITS else 1
    blocks_per_split = pl.cdiv(n_blocks, splits)
    last_block = n_blocks - 1

    def in_map(c, k):
        # Clamp so an uneven-split duplicate block stays in range; the kernel
        # zeroes its contribution via the unclamped row index.
        return (jnp.minimum(c * blocks_per_split + k, last_block), 0)

    kernel = functools.partial(
        _mse_kernel, rb=rb, chunk=chunk,
        blocks_per_split=blocks_per_split, total_rows=rows)

    partial_sums = pl.pallas_call(
        kernel,
        out_shape=jax.ShapeDtypeStruct((splits, SUBLANES, LANES), jnp.float32),
        grid_spec=pltpu.PrefetchScalarGridSpec(
            num_scalar_prefetch=0,
            grid=(splits, blocks_per_split),
            in_specs=[
                pl.BlockSpec((rb, LANES), in_map),
                pl.BlockSpec((rb, LANES), in_map),
            ],
            out_specs=pl.BlockSpec((None, SUBLANES, LANES), lambda c, k: (c, 0, 0)),
            scratch_shapes=[pltpu.VMEM((SUBLANES, LANES), jnp.float32)],
        ),
        compiler_params=pltpu.CompilerParams(
            dimension_semantics=("parallel", "arbitrary"),
            vmem_limit_bytes=48 * 1024 * 1024,
        ),
    )(p2d, t2d)

    # Tiny final reduce (splits x 8 x 128 f32) + division by the true count.
    return jnp.sum(partial_sums) / n_elems


if __name__ == "__main__":
    key = jax.random.PRNGKey(0)
    k1, k2 = jax.random.split(key)
    # Shapes consistent with a diffusion model's noise-prediction output (NCHW).
    pred = jax.random.normal(k1, (2, 4, 16, 16), dtype=jnp.float32)
    target = jax.random.normal(k2, (2, 4, 16, 16), dtype=jnp.float32)

    loss = diffusion_loss(pred, target)
    jax.block_until_ready(loss)

    # Correctness check against plain-JAX reference.
    ref = jnp.mean((pred - target) ** 2)
    assert jnp.allclose(loss, ref, rtol=1e-5, atol=1e-6), (loss, ref)

    print("KERNEL_OK")
</pallas_src>

<mosaic_0001>
module attributes {stable_mosaic.version = 11 : i64} {
  func.func @_mse_kernel(%arg0: i32, %arg1: i32, %arg2: memref<16x128xf32, #tpu.memory_space<vmem>>, %arg3: memref<16x128xf32, #tpu.memory_space<vmem>>, %arg4: memref<1x8x128xf32, #tpu.memory_space<vmem>>, %arg5: memref<8x128xf32, #tpu.memory_space<vmem>>) attributes {dimension_semantics = [#tpu.dimension_semantics<parallel>, #tpu.dimension_semantics<arbitrary>], iteration_bounds = array<i64: 1, 1>, scalar_prefetch = 0 : i64, scratch_operands = 1 : i64, tpu.core_type = #tpu.core_type<tc>, window_params = [{transform_indices = @transform_0, window_bounds = array<i64: 16, 128>}, {transform_indices = @transform_1, window_bounds = array<i64: 16, 128>}, {transform_indices = @transform_2, window_bounds = array<i64: 1, 8, 128>}]} {
    %c0_i32 = arith.constant 0 : i32
    %0 = arith.cmpi eq, %arg1, %c0_i32 : i32
    %1 = arith.extui %0 : i1 to i32
    %c0_i32_0 = arith.constant 0 : i32
    %2 = arith.cmpi ne, %1, %c0_i32_0 : i32
    scf.if %2 {
      %cst = arith.constant 0.000000e+00 : f32
      %17 = vector.broadcast %cst : f32 to vector<8x128xf32>
      %c0 = arith.constant 0 : index
      %c0_9 = arith.constant 0 : index
      %18 = vector.load %arg5[%c0, %c0_9] : memref<8x128xf32, #tpu.memory_space<vmem>>, vector<8x128xf32>
      tpu.vector_store %arg5[%c0, %c0_9], %17 {strides = array<i32>} : memref<8x128xf32, #tpu.memory_space<vmem>>, vector<8x128xf32>,
    } else {
    }
    %c1_i32 = arith.constant 1 : i32
    %3 = arith.muli %arg0, %c1_i32 : i32
    %4 = arith.addi %3, %arg1 : i32
    %c16_i32 = arith.constant 16 : i32
    %5 = arith.muli %4, %c16_i32 : i32
    %c16_i32_1 = arith.constant 16 : i32
    %6 = arith.addi %5, %c16_i32_1 : i32
    %c16_i32_2 = arith.constant 16 : i32
    %7 = arith.cmpi sle, %6, %c16_i32_2 : i32
    %8 = arith.extui %7 : i1 to i32
    %c0_i32_3 = arith.constant 0 : i32
    %9 = arith.cmpi ne, %8, %c0_i32_3 : i32
    scf.if %9 {
      %c0_i32_9 = arith.constant 0 : i32
      %c1_i32_10 = arith.constant 1 : i32
      %17 = arith.muli %c0_i32_9, %c1_i32_10 : i32
      %c0_i32_11 = arith.constant 0 : i32
      %18 = arith.addi %c0_i32_11, %17 : i32
      %c16_i32_12 = arith.constant 16 : i32
      %19 = arith.muli %18, %c16_i32_12 : i32
      %20 = tpu.assume_multiple %19, 16 : i32
      %21 = arith.index_cast %20 : i32 to index
      %c0 = arith.constant 0 : index
      %22 = vector.load %arg2[%21, %c0] : memref<16x128xf32, #tpu.memory_space<vmem>>, vector<16x128xf32>
      %23 = arith.index_cast %20 : i32 to index
      %c0_13 = arith.constant 0 : index
      %24 = vector.load %arg3[%23, %c0_13] : memref<16x128xf32, #tpu.memory_space<vmem>>, vector<16x128xf32>
      %25 = arith.subf %22, %24 : vector<16x128xf32>
      %26 = arith.mulf %25, %25 : vector<16x128xf32>
      %c0_14 = arith.constant 0 : index
      %c0_15 = arith.constant 0 : index
      %27 = vector.load %arg5[%c0_14, %c0_15] : memref<8x128xf32, #tpu.memory_space<vmem>>, vector<8x128xf32>
      %28 = vector.shape_cast %26 : vector<16x128xf32> to vector<2x8x128xf32>
      %cst = arith.constant dense<0.000000e+00> : vector<8x128xf32>
      %29 = vector.multi_reduction <add>, %28, %cst [0] : vector<2x8x128xf32> to vector<8x128xf32>
      %30 = arith.addf %27, %29 : vector<8x128xf32>
      %c0_16 = arith.constant 0 : index
      %c0_17 = arith.constant 0 : index
      %31 = vector.load %arg5[%c0_16, %c0_17] : memref<8x128xf32, #tpu.memory_space<vmem>>, vector<8x128xf32>
      tpu.vector_store %arg5[%c0_16, %c0_17], %30 {strides = array<i32>} : memref<8x128xf32, #tpu.memory_space<vmem>>, vector<8x128xf32>,
      %c1_i32_18 = arith.constant 1 : i32
    } else {
    }
    %c16_i32_4 = arith.constant 16 : i32
    %10 = arith.addi %5, %c16_i32_4 : i32
    %c16_i32_5 = arith.constant 16 : i32
    %11 = arith.cmpi sgt, %10, %c16_i32_5 : i32
    %12 = arith.extui %11 : i1 to i32
    %c0_i32_6 = arith.constant 0 : i32
    %13 = arith.cmpi ne, %12, %c0_i32_6 : i32
    scf.if %13 {
      %c0_i32_9 = arith.constant 0 : i32
      %c1_i32_10 = arith.constant 1 : i32
      %17 = arith.muli %c0_i32_9, %c1_i32_10 : i32
      %c0_i32_11 = arith.constant 0 : i32
      %18 = arith.addi %c0_i32_11, %17 : i32
      %c16_i32_12 = arith.constant 16 : i32
      %19 = arith.muli %18, %c16_i32_12 : i32
      %20 = tpu.assume_multiple %19, 16 : i32
      %21 = arith.index_cast %20 : i32 to index
      %c0 = arith.constant 0 : index
      %22 = vector.load %arg2[%21, %c0] : memref<16x128xf32, #tpu.memory_space<vmem>>, vector<16x128xf32>
      %23 = arith.index_cast %20 : i32 to index
      %c0_13 = arith.constant 0 : index
      %24 = vector.load %arg3[%23, %c0_13] : memref<16x128xf32, #tpu.memory_space<vmem>>, vector<16x128xf32>
      %25 = arith.subf %22, %24 : vector<16x128xf32>
      %26 = arith.mulf %25, %25 : vector<16x128xf32>
      %27 = arith.addi %5, %20 : i32
      %28 = tpu.iota {dimensions = array<i32: 0>} : vector<16x128xi32>
      %29 = vector.broadcast %27 : i32 to vector<16x128xi32>
      %30 = arith.addi %29, %28 : vector<16x128xi32>
      %c16_i32_14 = arith.constant 16 : i32
      %31 = vector.broadcast %c16_i32_14 : i32 to vector<16x128xi32>
      %32 = arith.cmpi slt, %30, %31 : vector<16x128xi32>
      %cst = arith.constant 0.000000e+00 : f32
      %33 = vector.broadcast %cst : f32 to vector<16x128xf32>
      %34 = arith.select %32, %26, %33 : vector<16x128xi1>, vector<16x128xf32>
      %c0_15 = arith.constant 0 : index
      %c0_16 = arith.constant 0 : index
      %35 = vector.load %arg5[%c0_15, %c0_16] : memref<8x128xf32, #tpu.memory_space<vmem>>, vector<8x128xf32>
      %36 = vector.shape_cast %34 : vector<16x128xf32> to vector<2x8x128xf32>
      %cst_17 = arith.constant dense<0.000000e+00> : vector<8x128xf32>
      %37 = vector.multi_reduction <add>, %36, %cst_17 [0] : vector<2x8x128xf32> to vector<8x128xf32>
      %38 = arith.addf %35, %37 : vector<8x128xf32>
      %c0_18 = arith.constant 0 : index
      %c0_19 = arith.constant 0 : index
      %39 = vector.load %arg5[%c0_18, %c0_19] : memref<8x128xf32, #tpu.memory_space<vmem>>, vector<8x128xf32>
      tpu.vector_store %arg5[%c0_18, %c0_19], %38 {strides = array<i32>} : memref<8x128xf32, #tpu.memory_space<vmem>>, vector<8x128xf32>,
      %c1_i32_20 = arith.constant 1 : i32
    } else {
    }
    %c0_i32_7 = arith.constant 0 : i32
    %14 = arith.cmpi eq, %arg1, %c0_i32_7 : i32
    %15 = arith.extui %14 : i1 to i32
    %c0_i32_8 = arith.constant 0 : i32
    %16 = arith.cmpi ne, %15, %c0_i32_8 : i32
    scf.if %16 {
      %c0 = arith.constant 0 : index
      %c0_9 = arith.constant 0 : index
      %17 = vector.load %arg5[%c0, %c0_9] : memref<8x128xf32, #tpu.memory_space<vmem>>, vector<8x128xf32>
      %c0_10 = arith.constant 0 : index
      %c0_11 = arith.constant 0 : index
      %c0_12 = arith.constant 0 : index
      %18 = vector.load %arg4[%c0_10, %c0_11, %c0_12] : memref<1x8x128xf32, #tpu.memory_space<vmem>>, vector<1x8x128xf32>
      %19 = vector.shape_cast %18 : vector<1x8x128xf32> to vector<8x128xf32>
      %20 = vector.shape_cast %17 : vector<8x128xf32> to vector<1x8x128xf32>
      tpu.vector_store %arg4[%c0_10, %c0_11, %c0_12], %20 {strides = array<i32>} : memref<1x8x128xf32, #tpu.memory_space<vmem>>, vector<1x8x128xf32>,
    } else {
    }
    return
  }
  func.func @transform_0(%arg0: i32, %arg1: i32) -> (i32, i32) {
    %c1_i32 = arith.constant 1 : i32
    %0 = arith.muli %arg0, %c1_i32 : i32
    %1 = arith.addi %0, %arg1 : i32
    %c0_i32 = arith.constant 0 : i32
    %2 = arith.minsi %1, %c0_i32 : i32
    %c0_i32_0 = arith.constant 0 : i32
    %c0_i32_1 = arith.constant 0 : i32
    return %2, %c0_i32_0 : i32, i32
  }
  func.func @transform_1(%arg0: i32, %arg1: i32) -> (i32, i32) {
    %c1_i32 = arith.constant 1 : i32
    %0 = arith.muli %arg0, %c1_i32 : i32
    %1 = arith.addi %0, %arg1 : i32
    %c0_i32 = arith.constant 0 : i32
    %2 = arith.minsi %1, %c0_i32 : i32
    %c0_i32_0 = arith.constant 0 : i32
    %c0_i32_1 = arith.constant 0 : i32
    return %2, %c0_i32_0 : i32, i32
  }
  func.func @transform_2(%arg0: i32, %arg1: i32) -> (i32, i32, i32) {
    %c0_i32 = arith.constant 0 : i32
    %c0_i32_0 = arith.constant 0 : i32
    %c0_i32_1 = arith.constant 0 : i32
    return %arg0, %c0_i32, %c0_i32_0 : i32, i32, i32
  }
}

</mosaic_0001>

<llo_original>
// kernel: tpu_custom_call.1
$region0: #{tpu_custom_call.1}
  #allocation0 [shape = 'u32[]', space=smem, size = 0x4, offset = 0x4, fixed_abs, tag = 'smem constant byte address 0x4 - core index']
  #allocation1 [shape = 'u32[144,128]{1,0:T(1,128)}', space=vmem, size = 0x12000, scoped, tag = 'internal scratch']
  #allocation2 [shape = 'f32[8,128]{1,0:T(8,128)}', space=vmem, size = 0x1000, scoped, tag = 'scratch operand']
  %s0 = inlined_call_operand.hbm [shape: f32[16,128], index: 0, kind: input, shape index: {}]
  %s1 = inlined_call_operand.hbm [shape: f32[16,128], index: 1, kind: input, shape index: {}]
  %s2 = inlined_call_operand.hbm [shape: f32[1,8,128], index: 2, kind: output, shape index: {}]
  %s3 = sld [smem:[#allocation0]]
  $region42: #{tpu_custom_call.1} parent=0
    _
  %s5 = ssub.s32 1, %s3
  %s6 = scalar_select 0, %s5, %s3
  $region1: #{tpu_custom_call.1} parent=0
    #allocation3 [shape = 'u8[8192]{0}', space=vmem, size = 0x2000, scoped, tag = 'input window, operand 0, single buffered']
    #allocation4 [shape = 's32[1]{0}', space=sflag, size = 0x4, scoped, tag = 'scoped memory for tpu_custom_call.1']
    #allocation5 [shape = 's32[1]{0}', space=sflag, size = 0x4, scoped, tag = 'scoped memory for tpu_custom_call.1']
    #allocation6 [shape = 'u8[8192]{0}', space=vmem, size = 0x2000, scoped, tag = 'input window, operand 1, single buffered']
    #allocation7 [shape = 's32[1]{0}', space=sflag, size = 0x4, scoped, tag = 'scoped memory for tpu_custom_call.1']
    #allocation8 [shape = 'u8[4096]{0}', space=vmem, size = 0x1000, scoped, tag = 'output window, operand 0, single buffered']
    %7 = vsyncpa [#allocation4], 0
    %8 = vsyncpa [#allocation7], 0
    %9 = vsyncpa [#allocation5], 0
    // Predicated region
    $region2: #{tpu_custom_call.1} parent=1 // pred_check
      _
    $region3: #{tpu_custom_call.1} parent=1 // pred_check_branch
      %11 = sbr.rel (0) target = $region5
    $region4: #{tpu_custom_call.1} parent=1 // pred_region
      %s12 = sadd.s32 0, 0
      %p13 = scmp.lt.s32.totalorder %s12, 0
      %s14 = scalar_select %p13, %s12, 0
      %s15 = smul.u32 2, %s14
      %s17 = ssub.s32 256, 256
      %18 = vsyncadd [#allocation4], %s17
      %s19 = smul.addr %s15, 128
      %s20 = scalar_lea.hbm %s0, %s19
      %s21 = sshll.u32 [#allocation3], 4
      %s22 = int_to_ptr.vmem [resolvable:$true] %s21
      %27 = dma.hbm_to_vmem [thread:$0]  %s20, 256, %s22, [#allocation4], 128, 128, 8
    $region5: #{tpu_custom_call.1} parent=1 // pred_fallthru
      _
    // Predicated region
    $region6: #{tpu_custom_call.1} parent=1 // pred_check
      _
    $region7: #{tpu_custom_call.1} parent=1 // pred_check_branch
      %29 = sbr.rel (0) target = $region9
    $region8: #{tpu_custom_call.1} parent=1 // pred_region
      %s30 = sadd.s32 0, 0
      %p31 = scmp.lt.s32.totalorder %s30, 0
      %s32 = scalar_select %p31, %s30, 0
      %s33 = smul.u32 2, %s32
      %s35 = ssub.s32 256, 256
      %36 = vsyncadd [#allocation7], %s35
      %s37 = smul.addr %s33, 128
      %s38 = scalar_lea.hbm %s1, %s37
      %s39 = sshll.u32 [#allocation6], 4
      %s40 = int_to_ptr.vmem [resolvable:$true] %s39
      %45 = dma.hbm_to_vmem [thread:$0]  %s38, 256, %s40, [#allocation7], 128, 128, 8
    $region9: #{tpu_custom_call.1} parent=1 // pred_fallthru
      _
    // Predicated region
    $region10: #{tpu_custom_call.1} parent=1 // pred_check
      _
    $region11: #{tpu_custom_call.1} parent=1 // pred_check_branch
      %47 = sbr.rel (0) target = $region13
    $region12: #{tpu_custom_call.1} parent=1 // pred_region
      %48 = dma.done [#allocation4], 256
    $region13: #{tpu_custom_call.1} parent=1 // pred_fallthru
      _
    // Predicated region
    $region14: #{tpu_custom_call.1} parent=1 // pred_check
      _
    $region15: #{tpu_custom_call.1} parent=1 // pred_check_branch
      %50 = sbr.rel (0) target = $region17
    $region16: #{tpu_custom_call.1} parent=1 // pred_region
      %51 = dma.done [#allocation7], 256
    $region17: #{tpu_custom_call.1} parent=1 // pred_fallthru
      _
    %s52 = sadd.s32 0, 0
    %p53 = scmp.lt.s32.totalorder %s52, 0
    %s54 = scalar_select %p53, %s52, 0
    %s55 = smul.u32 2, %s54
    %s56 = sadd.s32 0, 0
    %p57 = scmp.lt.s32.totalorder %s56, 0
    %s58 = scalar_select %p57, %s56, 0
    %s59 = smul.u32 2, %s58
    %p60 = scmp.eq.s32.totalorder 0, 0
    // Predicated region
    $region18: #{tpu_custom_call.1} parent=1 // pred_check
      %p61 = pneg %p60
    $region19: #{tpu_custom_call.1} parent=1 // pred_check_branch
      %63 = sbr.rel (%p61) target = $region21
    $region20: #{tpu_custom_call.1} parent=1 // pred_region
      %64 = vst [vmem:[#allocation2] sm:$0xff] 0.0
    $region21: #{tpu_custom_call.1} parent=1 // pred_fallthru
      _
    %s65 = sadd.s32 0, 0
    %s66 = smul.u32 %s65, 16
    %s67 = sadd.s32 %s66, 16
    %p68 = scmp.le.s32.totalorder %s67, 16
    // Predicated region
    $region22: #{tpu_custom_call.1} parent=1 // pred_check
      %p69 = pneg %p68
    $region23: #{tpu_custom_call.1} parent=1 // pred_check_branch
      %71 = sbr.rel (%p69) target = $region25
    $region24: #{tpu_custom_call.1} parent=1 // pred_region
      %v72 = vld [vmem:[#allocation3] sm:$0xff]
      %v73 = vld [vmem:[#allocation3 + $0x8] sm:$0xff]
      %v74 = vld [vmem:[#allocation6] sm:$0xff]
      %v75 = vld [vmem:[#allocation6 + $0x8] sm:$0xff]
      %v76 = vsub.f32 %v72, %v74
      %v77 = vsub.f32 %v73, %v75
      %v78 = vmul.f32 %v76, %v76
      %v79 = vmul.f32 %v77, %v77
      %v80 = vld [vmem:[#allocation2] sm:$0xff]
      %v81 = vadd.f32 %v78, %v79
      %v82 = vadd.f32 %v80, %v81
      %83 = vst [vmem:[#allocation2] sm:$0xff] %v82
    $region25: #{tpu_custom_call.1} parent=1 // pred_fallthru
      _
    %p84 = scmp.gt.s32.totalorder %s67, 16
    // Predicated region
    $region26: #{tpu_custom_call.1} parent=1 // pred_check
      %p85 = pneg %p84
    $region27: #{tpu_custom_call.1} parent=1 // pred_check_branch
      %87 = sbr.rel (%p85) target = $region29
    $region28: #{tpu_custom_call.1} parent=1 // pred_region
      %v88 = vld [vmem:[#allocation3] sm:$0xff]
      %v89 = vld [vmem:[#allocation3 + $0x8] sm:$0xff]
      %v90 = vld [vmem:[#allocation6] sm:$0xff]
      %v91 = vld [vmem:[#allocation6 + $0x8] sm:$0xff]
      %v92 = vsub.f32 %v88, %v90
      %v93 = vsub.f32 %v89, %v91
      %v94 = vmul.f32 %v92, %v92
      %v95 = vmul.f32 %v93, %v93
      %s96 = sadd.s32 %s66, 0
      %v97 = vlaneseq
      %v98 = vshrl.u32 %v97, 7
      %v99 = vadd.s32 %v98, 8
      %v100 = vstv %s96
      %v101 = vadd.s32 %v100, %v98
      %v102 = vadd.s32 %v100, %v99
      %vm103 = vcmp.lt.s32.totalorder %v101, 16
      %vm104 = vcmp.lt.s32.totalorder %v102, 16
      %v105 = vsel %vm103, %v94, 0.0
      %v106 = vsel %vm104, %v95, 0.0
      %v107 = vld [vmem:[#allocation2] sm:$0xff]
      %v108 = vadd.f32 %v105, %v106
      %v109 = vadd.f32 %v107, %v108
      %110 = vst [vmem:[#allocation2] sm:$0xff] %v109
    $region29: #{tpu_custom_call.1} parent=1 // pred_fallthru
      _
    // Predicated region
    $region30: #{tpu_custom_call.1} parent=1 // pred_check
      %p111 = pneg %p60
    $region31: #{tpu_custom_call.1} parent=1 // pred_check_branch
      %113 = sbr.rel (%p111) target = $region33
    $region32: #{tpu_custom_call.1} parent=1 // pred_region
      %v114 = vld [vmem:[#allocation2] sm:$0xff]
      %115 = vst [vmem:[#allocation8] sm:$0xff] %v114
    $region33: #{tpu_custom_call.1} parent=1 // pred_fallthru
      _
    // Predicated region
    $region34: #{tpu_custom_call.1} parent=1 // pred_check
      _
    $region35: #{tpu_custom_call.1} parent=1 // pred_check_branch
      %117 = sbr.rel (0) target = $region37
    $region36: #{tpu_custom_call.1} parent=1 // pred_region
      %s119 = ssub.s32 128, 128
      %120 = vsyncadd [#allocation5], %s119
      %s122 = sshll.u32 [#allocation8], 4
      %s123 = int_to_ptr.vmem [resolvable:$true] %s122
      %125 = dma.vmem_to_hbm [thread:$0]  %s123, 128, %s2, [#allocation5]
    $region37: #{tpu_custom_call.1} parent=1 // pred_fallthru
      _
    // Predicated region
    $region38: #{tpu_custom_call.1} parent=1 // pred_check
      _
    $region39: #{tpu_custom_call.1} parent=1 // pred_check_branch
      %127 = sbr.rel (0) target = $region41
    $region40: #{tpu_custom_call.1} parent=1 // pred_region
      %128 = dma.done [#allocation5], 128
    $region41: #{tpu_custom_call.1} parent=1 // pred_fallthru
      _
    %129 = vsyncpa [#allocation4], 1
    %130 = vsyncpa [#allocation7], 1
    %131 = vsyncpa [#allocation5], 1

</llo_original>
